<compile_context>
chip_gen: v6e
topology: v6e:2x2x1
jax: 0.10.0
libtpu: 0.0.40
codegen_flags: <defaults>
</compile_context>

<pallas_src>
import functools

import jax
import jax.numpy as jnp
from jax.experimental import pallas as pl
from jax.experimental.pallas import tpu as pltpu


def _round_up(n, m):
    return ((n + m - 1) // m) * m


def mlp_kernel(x_ref, wb_ref, w2_ref, w3_ref, o_ref, *, h_pad, p_pad):
    # wb_ref packs [w1; b1; b2; b3] as rows of a (4, F) slab -> one DMA instead of four.
    x = x_ref[...]                        # (TM, 1) f32
    w1 = wb_ref[0:1, :h_pad]              # (1, H_pad)
    b1 = wb_ref[1:2, :h_pad]              # (1, H_pad)
    b2 = wb_ref[2:3, :h_pad]              # (1, H_pad)
    b3 = wb_ref[3:4, :p_pad]              # (1, P_pad)

    # Layer 1: K=1 contraction == outer product -> keep it on the VPU
    # (broadcast mul + add), do not pay MXU fill/drain for one accumulation.
    h1 = jnp.maximum(x * w1 + b1, 0.0)    # (TM, H_pad)

    # Layers 2 & 3 on the MXU with f32 accumulation.
    h2 = jnp.dot(h1, w2_ref[...], preferred_element_type=jnp.float32) + b2
    h2 = jnp.maximum(h2, 0.0)
    o_ref[...] = jnp.dot(h2, w3_ref[...], preferred_element_type=jnp.float32) + b3


def upper_level_model_forward(x, params, *, block_rows=512):
    """Forward pass of UpperLevelModel.

    x: (B, 1) float32, or None for the module's default torch.ones(1, 1).
    params: w1 (1,H), b1 (1,H), w2 (H,H), b2 (1,H), w3 (H,P), b3 (1,P);
            weights stored (in_features, out_features) so y = x @ W + b
            (equivalent to PyTorch's x @ W_pt.T + b).
    """
    if x is None:
        x = jnp.ones((1, 1), jnp.float32)

    w1, b1, w2, b2, w3, b3 = (params["w1"], params["b1"], params["w2"],
                              params["b2"], params["w3"], params["b3"])
    B = x.shape[0]
    H = w1.shape[1]
    P = w3.shape[1]

    # Lane-dense padding: round feature dims to 128 so every output store is a
    # full (unmasked) vst and matmul tiles are lane-aligned.
    h_pad = _round_up(H, 128)
    p_pad = _round_up(P, 128)
    f = max(h_pad, p_pad)

    wb = jnp.zeros((4, f), jnp.float32)
    wb = wb.at[0, :H].set(w1[0])
    wb = wb.at[1, :H].set(b1[0])
    wb = wb.at[2, :H].set(b2[0])
    wb = wb.at[3, :P].set(b3[0])

    w2p = jnp.zeros((h_pad, h_pad), jnp.float32).at[:H, :H].set(w2)
    w3p = jnp.zeros((h_pad, p_pad), jnp.float32).at[:H, :P].set(w3)

    # 1-D grid over batch; weights/biases index to block (0,0) every step so
    # they stay VMEM-resident, activations are pipelined tile by tile.
    tm = B if B <= block_rows else block_rows
    grid = (pl.cdiv(B, tm),)

    kernel = functools.partial(mlp_kernel, h_pad=h_pad, p_pad=p_pad)

    out = pl.pallas_call(
        kernel,
        out_shape=jax.ShapeDtypeStruct((B, p_pad), jnp.float32),
        grid=grid,
        in_specs=[
            pl.BlockSpec((tm, 1), lambda i: (i, 0)),         # x tile (pipelined)
            pl.BlockSpec((4, f), lambda i: (0, 0)),          # packed w1/b1/b2/b3 (resident)
            pl.BlockSpec((h_pad, h_pad), lambda i: (0, 0)),  # w2 (resident)
            pl.BlockSpec((h_pad, p_pad), lambda i: (0, 0)),  # w3 (resident)
        ],
        out_specs=pl.BlockSpec((tm, p_pad), lambda i: (i, 0)),
        compiler_params=pltpu.CompilerParams(
            dimension_semantics=("parallel",),   # shard batch grid across TCs on v7x
            vmem_limit_bytes=32 * 1024 * 1024,   # well within v7x's 64 MiB physical VMEM
        ),
    )(x, wb, w2p, w3p)

    return out[:, :P]


def init_params(key, param_dim, hidden_dim=64):
    """Deterministic init mimicking nn.Linear default: U(-1/sqrt(fan_in), 1/sqrt(fan_in))."""
    ks = jax.random.split(key, 6)

    def linear(kw, kb, fan_in, fan_out):
        bound = 1.0 / jnp.sqrt(jnp.float32(fan_in))
        w = jax.random.uniform(kw, (fan_in, fan_out), jnp.float32, -bound, bound)
        b = jax.random.uniform(kb, (1, fan_out), jnp.float32, -bound, bound)
        return w, b

    w1, b1 = linear(ks[0], ks[1], 1, hidden_dim)
    w2, b2 = linear(ks[2], ks[3], hidden_dim, hidden_dim)
    w3, b3 = linear(ks[4], ks[5], hidden_dim, param_dim)
    return {"w1": w1, "b1": b1, "w2": w2, "b2": b2, "w3": w3, "b3": b3}


def reference_forward(x, p):
    h = jnp.maximum(x @ p["w1"] + p["b1"], 0.0)
    h = jnp.maximum(h @ p["w2"] + p["b2"], 0.0)
    return h @ p["w3"] + p["b3"]


if __name__ == "__main__":
    key = jax.random.PRNGKey(0)
    param_dim = 8
    hidden_dim = 32

    kp, kx, kb = jax.random.split(key, 3)
    params = init_params(kp, param_dim, hidden_dim)

    # Small batch: one "default" row of ones (the module's x=None path) + one random row.
    x = jnp.concatenate(
        [jnp.ones((1, 1), jnp.float32),
         jax.random.normal(kx, (1, 1), jnp.float32)], axis=0)  # (2, 1)

    out = jax.block_until_ready(upper_level_model_forward(x, params))
    ref = reference_forward(x, params)
    assert out.shape == (2, param_dim), out.shape
    assert jnp.allclose(out, ref, atol=1e-5, rtol=1e-5), "mismatch vs reference (B=2)"

    # Larger batch exercises the batch grid (multiple blocks, resident weights,
    # parallel dimension semantics).
    xb = jax.random.normal(kb, (1024, 1), jnp.float32)
    outb = jax.block_until_ready(upper_level_model_forward(xb, params))
    refb = reference_forward(xb, params)
    assert outb.shape == (1024, param_dim), outb.shape
    assert jnp.allclose(outb, refb, atol=1e-4, rtol=1e-4), "mismatch vs reference (B=1024)"

    print("KERNEL_OK")
</pallas_src>

<mosaic_0001>
module attributes {stable_mosaic.version = 11 : i64} {
  func.func @mlp_kernel(%arg0: i32, %arg1: memref<2x1xf32, #tpu.memory_space<vmem>>, %arg2: memref<4x128xf32, #tpu.memory_space<vmem>>, %arg3: memref<128x128xf32, #tpu.memory_space<vmem>>, %arg4: memref<128x128xf32, #tpu.memory_space<vmem>>, %arg5: memref<2x128xf32, #tpu.memory_space<vmem>>) attributes {dimension_semantics = [#tpu.dimension_semantics<parallel>], iteration_bounds = array<i64: 1>, scalar_prefetch = 0 : i64, scratch_operands = 0 : i64, tpu.core_type = #tpu.core_type<tc>, window_params = [{transform_indices = @transform_0, window_bounds = array<i64: 2, 1>}, {pipeline_mode = #tpu.pipeline_mode<synchronous>, transform_indices = @transform_1, window_bounds = array<i64: 4, 128>}, {pipeline_mode = #tpu.pipeline_mode<synchronous>, transform_indices = @transform_2, window_bounds = array<i64: 128, 128>}, {pipeline_mode = #tpu.pipeline_mode<synchronous>, transform_indices = @transform_3, window_bounds = array<i64: 128, 128>}, {transform_indices = @transform_4, window_bounds = array<i64: 2, 128>}]} {
    %c0 = arith.constant 0 : index
    %c0_0 = arith.constant 0 : index
    %0 = vector.load %arg1[%c0, %c0_0] : memref<2x1xf32, #tpu.memory_space<vmem>>, vector<2x1xf32>
    %c0_1 = arith.constant 0 : index
    %c0_2 = arith.constant 0 : index
    %1 = vector.load %arg2[%c0_1, %c0_2] : memref<4x128xf32, #tpu.memory_space<vmem>>, vector<1x128xf32>
    %c1 = arith.constant 1 : index
    %c0_3 = arith.constant 0 : index
    %2 = vector.load %arg2[%c1, %c0_3] : memref<4x128xf32, #tpu.memory_space<vmem>>, vector<1x128xf32>
    %c2 = arith.constant 2 : index
    %c0_4 = arith.constant 0 : index
    %3 = vector.load %arg2[%c2, %c0_4] : memref<4x128xf32, #tpu.memory_space<vmem>>, vector<1x128xf32>
    %c3 = arith.constant 3 : index
    %c0_5 = arith.constant 0 : index
    %4 = vector.load %arg2[%c3, %c0_5] : memref<4x128xf32, #tpu.memory_space<vmem>>, vector<1x128xf32>
    %5 = vector.broadcast %0 : vector<2x1xf32> to vector<2x128xf32>
    %6 = vector.broadcast %1 : vector<1x128xf32> to vector<2x128xf32>
    %7 = arith.mulf %5, %6 : vector<2x128xf32>
    %8 = vector.broadcast %2 : vector<1x128xf32> to vector<2x128xf32>
    %9 = arith.addf %7, %8 : vector<2x128xf32>
    %cst = arith.constant 0.000000e+00 : f32
    %10 = vector.broadcast %cst : f32 to vector<2x128xf32>
    %11 = arith.maximumf %9, %10 : vector<2x128xf32>
    %c0_6 = arith.constant 0 : index
    %c0_7 = arith.constant 0 : index
    %12 = vector.load %arg3[%c0_6, %c0_7] : memref<128x128xf32, #tpu.memory_space<vmem>>, vector<128x128xf32>
    %cst_8 = arith.constant dense<0.000000e+00> : vector<2x128xf32>
    %13 = tpu.matmul %11, %12, %cst_8 {dimension_numbers = #tpu.dot_dimension_numbers<[1], [0], [0], [1], [0, 0, 1, 1], [], []>} : vector<2x128xf32>, vector<128x128xf32>, vector<2x128xf32> -> vector<2x128xf32>
    %14 = vector.broadcast %3 : vector<1x128xf32> to vector<2x128xf32>
    %15 = arith.addf %13, %14 : vector<2x128xf32>
    %cst_9 = arith.constant 0.000000e+00 : f32
    %16 = vector.broadcast %cst_9 : f32 to vector<2x128xf32>
    %17 = arith.maximumf %15, %16 : vector<2x128xf32>
    %c0_10 = arith.constant 0 : index
    %c0_11 = arith.constant 0 : index
    %18 = vector.load %arg4[%c0_10, %c0_11] : memref<128x128xf32, #tpu.memory_space<vmem>>, vector<128x128xf32>
    %cst_12 = arith.constant dense<0.000000e+00> : vector<2x128xf32>
    %19 = tpu.matmul %17, %18, %cst_12 {dimension_numbers = #tpu.dot_dimension_numbers<[1], [0], [0], [1], [0, 0, 1, 1], [], []>} : vector<2x128xf32>, vector<128x128xf32>, vector<2x128xf32> -> vector<2x128xf32>
    %20 = vector.broadcast %4 : vector<1x128xf32> to vector<2x128xf32>
    %21 = arith.addf %19, %20 : vector<2x128xf32>
    %c0_13 = arith.constant 0 : index
    %c0_14 = arith.constant 0 : index
    %22 = vector.load %arg5[%c0_13, %c0_14] : memref<2x128xf32, #tpu.memory_space<vmem>>, vector<2x128xf32>
    tpu.vector_store %arg5[%c0_13, %c0_14], %21 {strides = array<i32>} : memref<2x128xf32, #tpu.memory_space<vmem>>, vector<2x128xf32>,
    return
  }
  func.func @transform_0(%arg0: i32) -> (i32, i32) {
    %c0_i32 = arith.constant 0 : i32
    %c0_i32_0 = arith.constant 0 : i32
    return %arg0, %c0_i32 : i32, i32
  }
  func.func @transform_1(%arg0: i32) -> (i32, i32) {
    %c0_i32 = arith.constant 0 : i32
    %c0_i32_0 = arith.constant 0 : i32
    %c0_i32_1 = arith.constant 0 : i32
    return %c0_i32, %c0_i32_0 : i32, i32
  }
  func.func @transform_2(%arg0: i32) -> (i32, i32) {
    %c0_i32 = arith.constant 0 : i32
    %c0_i32_0 = arith.constant 0 : i32
    %c0_i32_1 = arith.constant 0 : i32
    return %c0_i32, %c0_i32_0 : i32, i32
  }
  func.func @transform_3(%arg0: i32) -> (i32, i32) {
    %c0_i32 = arith.constant 0 : i32
    %c0_i32_0 = arith.constant 0 : i32
    %c0_i32_1 = arith.constant 0 : i32
    return %c0_i32, %c0_i32_0 : i32, i32
  }
  func.func @transform_4(%arg0: i32) -> (i32, i32) {
    %c0_i32 = arith.constant 0 : i32
    %c0_i32_0 = arith.constant 0 : i32
    return %arg0, %c0_i32 : i32, i32
  }
}

</mosaic_0001>

<llo_original>
// kernel: tpu_custom_call.1
$region0: #{tpu_custom_call.1}
  #allocation0 [shape = 'u32[]', space=smem, size = 0x4, offset = 0x4, fixed_abs, tag = 'smem constant byte address 0x4 - core index']
  #allocation1 [shape = 'u32[144,128]{1,0:T(1,128)}', space=vmem, size = 0x12000, scoped, tag = 'internal scratch']
  %s0 = inlined_call_operand.vmem [shape: f32[2,1], index: 0, kind: input, shape index: {}]
  %s1 = inlined_call_operand.vmem [shape: f32[4,128], index: 1, kind: input, shape index: {}]
  %s2 = inlined_call_operand.hbm [shape: f32[128,128], index: 2, kind: input, shape index: {}]
  %s3 = inlined_call_operand.hbm [shape: f32[128,128], index: 3, kind: input, shape index: {}]
  %s4 = inlined_call_operand.hbm [shape: f32[2,128], index: 4, kind: output, shape index: {}]
  %s5 = sld [smem:[#allocation0]]
  $region34: #{tpu_custom_call.1} parent=0
    _
  %s7 = ssub.s32 1, %s5
  %s8 = scalar_select 0, %s7, %s5
  $region1: #{tpu_custom_call.1} parent=0
    #allocation2 [shape = 'u8[65536]{0}', space=vmem, size = 0x10000, scoped, tag = 'input window, operand 2, single buffered']
    #allocation3 [shape = 's32[1]{0}', space=sflag, size = 0x4, scoped, tag = 'scoped memory for tpu_custom_call.1']
    #allocation4 [shape = 's32[1]{0}', space=sflag, size = 0x4, scoped, tag = 'scoped memory for tpu_custom_call.1']
    #allocation5 [shape = 'u8[65536]{0}', space=vmem, size = 0x10000, scoped, tag = 'input window, operand 3, single buffered']
    #allocation6 [shape = 's32[1]{0}', space=sflag, size = 0x4, scoped, tag = 'scoped memory for tpu_custom_call.1']
    #allocation7 [shape = 'u8[1024]{0}', space=vmem, size = 0x400, scoped, tag = 'output window, operand 0, single buffered']
    %9 = vsyncpa [#allocation3], 0
    %10 = vsyncpa [#allocation6], 0
    %11 = vsyncpa [#allocation4], 0
    // Predicated region
    $region2: #{tpu_custom_call.1} parent=1 // pred_check
      _
    $region3: #{tpu_custom_call.1} parent=1 // pred_check_branch
      %13 = sbr.rel (0) target = $region5
    $region4: #{tpu_custom_call.1} parent=1 // pred_region
      _
    $region5: #{tpu_custom_call.1} parent=1 // pred_fallthru
      _
    // Predicated region
    $region6: #{tpu_custom_call.1} parent=1 // pred_check
      _
    $region7: #{tpu_custom_call.1} parent=1 // pred_check_branch
      %15 = sbr.rel (0) target = $region9
    $region8: #{tpu_custom_call.1} parent=1 // pred_region
      _
    $region9: #{tpu_custom_call.1} parent=1 // pred_fallthru
      _
    // Predicated region
    $region10: #{tpu_custom_call.1} parent=1 // pred_check
      _
    $region11: #{tpu_custom_call.1} parent=1 // pred_check_branch
      %17 = sbr.rel (0) target = $region13
    $region12: #{tpu_custom_call.1} parent=1 // pred_region
      %s19 = ssub.s32 2048, 2048
      %20 = vsyncadd [#allocation3], %s19
      %s21 = sshll.u32 [#allocation2], 4
      %s22 = int_to_ptr.vmem [resolvable:$true] %s21
      %27 = dma.hbm_to_vmem [thread:$0]  %s2, 2048, %s22, [#allocation3], 128, 128, 8
    $region13: #{tpu_custom_call.1} parent=1 // pred_fallthru
      _
    // Predicated region
    $region14: #{tpu_custom_call.1} parent=1 // pred_check
      _
    $region15: #{tpu_custom_call.1} parent=1 // pred_check_branch
      %29 = sbr.rel (0) target = $region17
    $region16: #{tpu_custom_call.1} parent=1 // pred_region
      %s31 = ssub.s32 2048, 2048
      %32 = vsyncadd [#allocation6], %s31
      %s33 = sshll.u32 [#allocation5], 4
      %s34 = int_to_ptr.vmem [resolvable:$true] %s33
      %39 = dma.hbm_to_vmem [thread:$0]  %s3, 2048, %s34, [#allocation6], 128, 128, 8
    $region17: #{tpu_custom_call.1} parent=1 // pred_fallthru
      _
    // Predicated region
    $region18: #{tpu_custom_call.1} parent=1 // pred_check
      _
    $region19: #{tpu_custom_call.1} parent=1 // pred_check_branch
      %41 = sbr.rel (0) target = $region21
    $region20: #{tpu_custom_call.1} parent=1 // pred_region
      %42 = dma.done [#allocation3], 2048
    $region21: #{tpu_custom_call.1} parent=1 // pred_fallthru
      _
    // Predicated region
    $region22: #{tpu_custom_call.1} parent=1 // pred_check
      _
    $region23: #{tpu_custom_call.1} parent=1 // pred_check_branch
      %44 = sbr.rel (0) target = $region25
    $region24: #{tpu_custom_call.1} parent=1 // pred_region
      %45 = dma.done [#allocation6], 2048
    $region25: #{tpu_custom_call.1} parent=1 // pred_fallthru
      _
    %v46 = vld [vmem:[%s0] sm:$0x3]
    %v47 = vld [vmem:[%s1] sm:$0x1]
    %v48 = vld [vmem:[%s1 + $0x1] sm:$0x1]
    %v49 = vld [vmem:[%s1 + $0x2] sm:$0x1]
    %v50 = vld [vmem:[%s1 + $0x3] sm:$0x1]
    %52 = vset.pattern.permute.xlu0 0
    %53 = vperm.xlu0 %52, %v46
    %v54 = vpop.permute.xlu0 %53
    %v56 = vlaneseq
    %v57 = vshrl.u32 %v56, 7
    %v58 = vsub.s32 0, %v57
    %v59 = vrot.slane %v47, %v58
    %v60 = vmul.f32 %v54, %v59
    %v61 = vlaneseq
    %v62 = vshrl.u32 %v61, 7
    %v63 = vsub.s32 0, %v62
    %v64 = vrot.slane %v48, %v63
    %v65 = vadd.f32 %v60, %v64
    %v66 = vmax.f32 %v65, 0.0
    %v67 = vld [vmem:[#allocation2] sm:$0xff]
    %v68 = vld [vmem:[#allocation2 + $0x8] sm:$0xff]
    %v69 = vld [vmem:[#allocation2 + $0x10] sm:$0xff]
    %v70 = vld [vmem:[#allocation2 + $0x18] sm:$0xff]
    %v71 = vld [vmem:[#allocation2 + $0x20] sm:$0xff]
    %v72 = vld [vmem:[#allocation2 + $0x28] sm:$0xff]
    %v73 = vld [vmem:[#allocation2 + $0x30] sm:$0xff]
    %v74 = vld [vmem:[#allocation2 + $0x38] sm:$0xff]
    %v75 = vld [vmem:[#allocation2 + $0x40] sm:$0xff]
    %v76 = vld [vmem:[#allocation2 + $0x48] sm:$0xff]
    %v77 = vld [vmem:[#allocation2 + $0x50] sm:$0xff]
    %v78 = vld [vmem:[#allocation2 + $0x58] sm:$0xff]
    %v79 = vld [vmem:[#allocation2 + $0x60] sm:$0xff]
    %v80 = vld [vmem:[#allocation2 + $0x68] sm:$0xff]
    %v81 = vld [vmem:[#allocation2 + $0x70] sm:$0xff]
    %v82 = vld [vmem:[#allocation2 + $0x78] sm:$0xff]
    %v83 = vlaneseq
    %v84 = vshrl.u32 %v83, 7
    %v85 = vsub.s32 0, %v84
    %v86 = vrot.slane %v49, %v85
    %87 = vmatprep.subr.mxu0 0.0
    %88 = vmatpush1.msra.mxu0 %v82
    %89 = vmatprep.subr.mxu0 0.0
    %90 = vmatpush1.msra.mxu0 %v81
    %91 = vmatprep.subr.mxu0 0.0
    %92 = vmatpush1.msra.mxu0 %v80
    %93 = vmatprep.subr.mxu0 0.0
    %94 = vmatpush1.msra.mxu0 %v79
    %95 = vmatprep.subr.mxu0 0.0
    %96 = vmatpush1.msra.mxu0 %v78
    %97 = vmatprep.subr.mxu0 0.0
    %98 = vmatpush1.msra.mxu0 %v77
    %99 = vmatprep.subr.mxu0 0.0
    %100 = vmatpush1.msra.mxu0 %v76
    %101 = vmatprep.subr.mxu0 0.0
    %102 = vmatpush1.msra.mxu0 %v75
    %103 = vmatprep.subr.mxu0 0.0
    %104 = vmatpush1.msra.mxu0 %v74
    %105 = vmatprep.subr.mxu0 0.0
    %106 = vmatpush1.msra.mxu0 %v73
    %107 = vmatprep.subr.mxu0 0.0
    %108 = vmatpush1.msra.mxu0 %v72
    %109 = vmatprep.subr.mxu0 0.0
    %110 = vmatpush1.msra.mxu0 %v71
    %111 = vmatprep.subr.mxu0 0.0
    %112 = vmatpush1.msra.mxu0 %v70
    %113 = vmatprep.subr.mxu0 0.0
    %114 = vmatpush1.msra.mxu0 %v69
    %115 = vmatprep.subr.mxu0 0.0
    %116 = vmatpush1.msra.mxu0 %v68
    %117 = vmatprep.subr.mxu0 0.0
    %118 = vmatpush1.msra.mxu0 %v67
    %119 = vmatprep.subr.mxu0 0.0
    %120 = vmatpush2.msra.mxu0 0.0
    %121 = vmatprep.subr.mxu0 0.0
    %122 = vmatpush2.msra.mxu0 0.0
    %123 = vmatprep.subr.mxu0 0.0
    %124 = vmatpush2.msra.mxu0 0.0
    %125 = vmatprep.subr.mxu0 0.0
    %126 = vmatpush2.msra.mxu0 0.0
    %127 = vmatprep.subr.mxu0 0.0
    %128 = vmatpush2.msra.mxu0 0.0
    %129 = vmatprep.subr.mxu0 0.0
    %130 = vmatpush2.msra.mxu0 0.0
    %131 = vmatprep.subr.mxu0 0.0
    %132 = vmatpush2.msra.mxu0 0.0
    %133 = vmatprep.subr.mxu0 0.0
    %134 = vmatpush2.msra.mxu0 0.0
    %135 = vmatprep.subr.mxu0 0.0
    %136 = vmatpush2.msra.mxu0 0.0
    %137 = vmatprep.subr.mxu0 0.0
    %138 = vmatpush2.msra.mxu0 0.0
    %139 = vmatprep.subr.mxu0 0.0
    %140 = vmatpush2.msra.mxu0 0.0
    %141 = vmatprep.subr.mxu0 0.0
    %142 = vmatpush2.msra.mxu0 0.0
    %143 = vmatprep.subr.mxu0 0.0
    %144 = vmatpush2.msra.mxu0 0.0
    %145 = vmatprep.subr.mxu0 0.0
    %146 = vmatpush2.msra.mxu0 0.0
    %147 = vmatprep.subr.mxu0 0.0
    %148 = vmatpush2.msra.mxu0 0.0
    %149 = vmatprep.subr.mxu0 0.0
    %150 = vmatpush2.msra.mxu0 0.0
    %151 = vmatprep.mubr.f32.mxu0 0.0
    %152 = vmatmul.mubr.f32.gmra.mxu0 %v66
    %v153 = vpop.f32.mrf.mxu0
    %v154 = vadd.f32 %v86, %v153
    %v155 = vpop.f32.mrf.mxu0
    %156 = vdwg.mxu0
    %v157 = vmax.f32 %v154, 0.0
    %v158 = vld [vmem:[#allocation5] sm:$0xff]
    %v159 = vld [vmem:[#allocation5 + $0x8] sm:$0xff]
    %v160 = vld [vmem:[#allocation5 + $0x10] sm:$0xff]
    %v161 = vld [vmem:[#allocation5 + $0x18] sm:$0xff]
    %v162 = vld [vmem:[#allocation5 + $0x20] sm:$0xff]
    %v163 = vld [vmem:[#allocation5 + $0x28] sm:$0xff]
    %v164 = vld [vmem:[#allocation5 + $0x30] sm:$0xff]
    %v165 = vld [vmem:[#allocation5 + $0x38] sm:$0xff]
    %v166 = vld [vmem:[#allocation5 + $0x40] sm:$0xff]
    %v167 = vld [vmem:[#allocation5 + $0x48] sm:$0xff]
    %v168 = vld [vmem:[#allocation5 + $0x50] sm:$0xff]
    %v169 = vld [vmem:[#allocation5 + $0x58] sm:$0xff]
    %v170 = vld [vmem:[#allocation5 + $0x60] sm:$0xff]
    %v171 = vld [vmem:[#allocation5 + $0x68] sm:$0xff]
    %v172 = vld [vmem:[#allocation5 + $0x70] sm:$0xff]
    %v173 = vld [vmem:[#allocation5 + $0x78] sm:$0xff]
    %v174 = vlaneseq
    %v175 = vshrl.u32 %v174, 7
    %v176 = vsub.s32 0, %v175
    %v177 = vrot.slane %v50, %v176
    %178 = vmatprep.subr.mxu0 0.0
    %179 = vmatpush1.msra.mxu0 %v173
    %180 = vmatprep.subr.mxu0 0.0
    %181 = vmatpush1.msra.mxu0 %v172
    %182 = vmatprep.subr.mxu0 0.0
    %183 = vmatpush1.msra.mxu0 %v171
    %184 = vmatprep.subr.mxu0 0.0
    %185 = vmatpush1.msra.mxu0 %v170
    %186 = vmatprep.subr.mxu0 0.0
    %187 = vmatpush1.msra.mxu0 %v169
    %188 = vmatprep.subr.mxu0 0.0
    %189 = vmatpush1.msra.mxu0 %v168
    %190 = vmatprep.subr.mxu0 0.0
    %191 = vmatpush1.msra.mxu0 %v167
    %192 = vmatprep.subr.mxu0 0.0
    %193 = vmatpush1.msra.mxu0 %v166
    %194 = vmatprep.subr.mxu0 0.0
    %195 = vmatpush1.msra.mxu0 %v165
    %196 = vmatprep.subr.mxu0 0.0
    %197 = vmatpush1.msra.mxu0 %v164
    %198 = vmatprep.subr.mxu0 0.0
    %199 = vmatpush1.msra.mxu0 %v163
    %200 = vmatprep.subr.mxu0 0.0
    %201 = vmatpush1.msra.mxu0 %v162
    %202 = vmatprep.subr.mxu0 0.0
    %203 = vmatpush1.msra.mxu0 %v161
    %204 = vmatprep.subr.mxu0 0.0
    %205 = vmatpush1.msra.mxu0 %v160
    %206 = vmatprep.subr.mxu0 0.0
    %207 = vmatpush1.msra.mxu0 %v159
    %208 = vmatprep.subr.mxu0 0.0
    %209 = vmatpush1.msra.mxu0 %v158
    %210 = vmatprep.subr.mxu0 0.0
    %211 = vmatpush2.msra.mxu0 0.0
    %212 = vmatprep.subr.mxu0 0.0
    %213 = vmatpush2.msra.mxu0 0.0
    %214 = vmatprep.subr.mxu0 0.0
    %215 = vmatpush2.msra.mxu0 0.0
    %216 = vmatprep.subr.mxu0 0.0
    %217 = vmatpush2.msra.mxu0 0.0
    %218 = vmatprep.subr.mxu0 0.0
    %219 = vmatpush2.msra.mxu0 0.0
    %220 = vmatprep.subr.mxu0 0.0
    %221 = vmatpush2.msra.mxu0 0.0
    %222 = vmatprep.subr.mxu0 0.0
    %223 = vmatpush2.msra.mxu0 0.0
    %224 = vmatprep.subr.mxu0 0.0
    %225 = vmatpush2.msra.mxu0 0.0
    %226 = vmatprep.subr.mxu0 0.0
    %227 = vmatpush2.msra.mxu0 0.0
    %228 = vmatprep.subr.mxu0 0.0
    %229 = vmatpush2.msra.mxu0 0.0
    %230 = vmatprep.subr.mxu0 0.0
    %231 = vmatpush2.msra.mxu0 0.0
    %232 = vmatprep.subr.mxu0 0.0
    %233 = vmatpush2.msra.mxu0 0.0
    %234 = vmatprep.subr.mxu0 0.0
    %235 = vmatpush2.msra.mxu0 0.0
    %236 = vmatprep.subr.mxu0 0.0
    %237 = vmatpush2.msra.mxu0 0.0
    %238 = vmatprep.subr.mxu0 0.0
    %239 = vmatpush2.msra.mxu0 0.0
    %240 = vmatprep.subr.mxu0 0.0
    %241 = vmatpush2.msra.mxu0 0.0
    %242 = vmatprep.mubr.f32.mxu0 0.0
    %243 = vmatmul.mubr.f32.gmra.mxu0 %v157
    %v244 = vpop.f32.mrf.mxu0
    %v245 = vadd.f32 %v177, %v244
    %v246 = vpop.f32.mrf.mxu0
    %247 = vdwg.mxu0
    %248 = vst [vmem:[#allocation7] sm:$0x3] %v245
    // Predicated region
    $region26: #{tpu_custom_call.1} parent=1 // pred_check
      _
    $region27: #{tpu_custom_call.1} parent=1 // pred_check_branch
      %250 = sbr.rel (0) target = $region29
    $region28: #{tpu_custom_call.1} parent=1 // pred_region
      %s252 = ssub.s32 32, 32
      %253 = vsyncadd [#allocation4], %s252
      %s255 = sshll.u32 [#allocation7], 4
      %s256 = int_to_ptr.vmem [resolvable:$true] %s255
      %258 = dma.vmem_to_hbm [thread:$0]  %s256, 32, %s4, [#allocation4]
    $region29: #{tpu_custom_call.1} parent=1 // pred_fallthru
      _
    // Predicated region
    $region30: #{tpu_custom_call.1} parent=1 // pred_check
      _
    $region31: #{tpu_custom_call.1} parent=1 // pred_check_branch
      %260 = sbr.rel (0) target = $region33
    $region32: #{tpu_custom_call.1} parent=1 // pred_region
      %261 = dma.done [#allocation4], 32
    $region33: #{tpu_custom_call.1} parent=1 // pred_fallthru
      _
    %262 = vsyncpa [#allocation3], 1
    %263 = vsyncpa [#allocation6], 1
    %264 = vsyncpa [#allocation4], 1

</llo_original>
